<compile_context>
chip_gen: v7x
topology: tpu7x:2x2x1
jax: 0.10.0
libtpu: 0.0.40
codegen_flags: <defaults>
</compile_context>

<pallas_src>
import jax
import jax.numpy as jnp
from jax.experimental import pallas as pl
from jax.experimental.pallas import tpu as pltpu

LANES = 128                      # vreg lane width (last dim -> lanes, unmasked vst)
MAX_BLOCK_ROWS = 2048            # 2048 x 128 f32 = 1 MiB per block buffer
MAX_BLOCK_LANES = MAX_BLOCK_ROWS * LANES
PALLAS_MIN_ELEMENTS = 64 * 1024  # below this the zero-cost reshape is strictly better


def _copy_kernel(w_ref, o_ref):
    # TODO(synk): fuse the first real consumer of the (1, T, 1, 1) wavelengths
    # (per-wavelength scale / phase compute) into this body; as a bare identity
    # it is a pure HBM round trip and exists only as an optional fusion anchor.
    o_ref[...] = w_ref[...]


def _pick_block(extent, max_block, granule):
    """Largest block <= max_block that is a multiple of `granule`, preferring
    >= 2 grid steps (v7x megacore) when `extent` allows.  Falls back to the
    full extent (always a legal block dim) when extent < granule."""
    if extent <= granule:
        return extent
    target = min(max_block, extent)
    if extent >= 2 * granule:
        target = min(target, -(-extent // 2))   # ceil(extent / 2) -> >=2 steps
    return max(granule, (target // granule) * granule)


@jax.jit
def _expand_btpc_pallas(wavelengths):
    """(T,) -> (1, T, 1, 1) via a Pallas copy with no pad / post-slice copies."""
    n_time = wavelengths.shape[0]          # static at trace time
    dtype = wavelengths.dtype

    if n_time % LANES == 0:
        # Lane+sublane dense (rows, 128) slab; this reshape is a bitcast (no copy).
        rows = n_time // LANES
        x = wavelengths.reshape(rows, LANES)
        block_rows = _pick_block(rows, MAX_BLOCK_ROWS, 8)   # multiple of 8 (v5e vst)
        grid = (pl.cdiv(rows, block_rows),)
        block_shape = (block_rows, LANES)
        index_map = lambda i: (i, 0)
    else:
        # Ragged T: (1, T) view (bitcast), tile along lanes; Pallas masks the
        # partial boundary block (OOB writes are dropped), so no pad is needed.
        x = wavelengths.reshape(1, n_time)
        block_lanes = _pick_block(n_time, MAX_BLOCK_LANES, LANES)
        grid = (pl.cdiv(n_time, block_lanes),)
        block_shape = (1, block_lanes)
        index_map = lambda i: (0, i)

    out = pl.pallas_call(
        _copy_kernel,
        out_shape=jax.ShapeDtypeStruct(x.shape, dtype),
        grid=grid,
        in_specs=[pl.BlockSpec(block_shape, index_map)],
        out_specs=pl.BlockSpec(block_shape, index_map),
        compiler_params=pltpu.CompilerParams(
            dimension_semantics=("parallel",),   # shard grid over both v7x TCs
        ),
    )(x)

    # Present the BTPC view; adding singleton dims is a bitcast (no copy).
    return out.reshape(1, n_time, 1, 1)


class WavelengthContainer:
    """JAX re-implementation of holotorch's WavelengthContainer (forward path).

    Only forward()-relevant state is kept: the wavelengths buffer (PyTorch
    registered buffer `_data_tensor`) and its implied T(n_time) dimension.
    detach()/cpu()/write_data_tensor() are torch buffer plumbing with no
    kernel equivalent.
    """

    def __init__(self, wavelengths, center_wavelength=None):
        w = jnp.asarray(wavelengths, dtype=jnp.float32)
        if w.ndim == 0:
            w = w.reshape(1)
        if w.ndim != 1:
            # TODO(synk): multi-dim wavelengths require an explicit
            # TensorDimension (not modeled here), matching the PyTorch error.
            raise ValueError(
                "Only the default path (1-D wavelengths, tensor_dimension=T) "
                "is implemented."
            )
        self.data_tensor = w                      # shape (T,)
        self.n_time = w.shape[0]
        if center_wavelength is None:
            center_wavelength = w
        cw = jnp.asarray(center_wavelength, dtype=jnp.float32)
        if cw.ndim == 0:
            cw = cw.reshape(1)
        self.center_wavelength = cw

    @property
    def shape(self):
        return self.data_tensor.shape

    def forward(self, use_pallas=None):
        if use_pallas is None:
            # Auto-gate: only route through the kernel for large T (or when a
            # fused consumer exists); the reshape is free and always wins at
            # realistic wavelength counts (8 .. a few thousand).
            use_pallas = self.n_time >= PALLAS_MIN_ELEMENTS
        if not use_pallas:
            # torch .view((1, T, 1, 1)) is a zero-cost metadata view; so is this.
            return self.data_tensor.reshape(1, self.n_time, 1, 1)
        return _expand_btpc_pallas(self.data_tensor)

    def __call__(self, use_pallas=None):
        return self.forward(use_pallas=use_pallas)


if __name__ == "__main__":
    key = jax.random.PRNGKey(0)

    # Small, module-consistent shape: 8 spectral samples in [400nm, 700nm).
    n_time = 8
    wavelengths = 400e-9 + 300e-9 * jax.random.uniform(
        key, (n_time,), dtype=jnp.float32
    )
    ref = jnp.reshape(wavelengths, (1, n_time, 1, 1))

    container = WavelengthContainer(wavelengths)

    # Default (recommended) path: pure metadata reshape, auto-gated away from Pallas.
    view_out = jax.block_until_ready(container())
    assert view_out.shape == (1, n_time, 1, 1), view_out.shape
    assert bool(jnp.array_equal(view_out, ref))

    # Forced Pallas path, tiny T: single full (1, 8) block.
    pallas_out = jax.block_until_ready(container(use_pallas=True))
    assert pallas_out.shape == (1, n_time, 1, 1), pallas_out.shape
    assert pallas_out.dtype == jnp.float32
    assert bool(jnp.array_equal(pallas_out, ref))

    # Ragged (non-multiple-of-128) T: (1, 300) tiled along lanes, boundary-masked.
    n_time2 = 300
    w2 = 400e-9 + 300e-9 * jax.random.uniform(
        jax.random.PRNGKey(0), (n_time2,), dtype=jnp.float32
    )
    c2 = WavelengthContainer(w2)
    out2 = jax.block_until_ready(c2(use_pallas=True))
    assert bool(jnp.array_equal(out2, w2.reshape(1, n_time2, 1, 1)))

    # Dense (multiple-of-128) T: (24, 128) slab, multi-step "parallel" grid.
    n_time3 = 24 * 128
    w3 = 400e-9 + 300e-9 * jax.random.uniform(
        jax.random.PRNGKey(0), (n_time3,), dtype=jnp.float32
    )
    c3 = WavelengthContainer(w3)
    out3 = jax.block_until_ready(c3(use_pallas=True))
    assert bool(jnp.array_equal(out3, w3.reshape(1, n_time3, 1, 1)))

    print("KERNEL_OK")
</pallas_src>

<mosaic_0001>
module attributes {stable_mosaic.version = 11 : i64} {
  func.func @_copy_kernel(%arg0: i32, %arg1: memref<1x8xf32, #tpu.memory_space<vmem>>, %arg2: memref<1x8xf32, #tpu.memory_space<vmem>>) attributes {dimension_semantics = [#tpu.dimension_semantics<parallel>], iteration_bounds = array<i64: 1>, scalar_prefetch = 0 : i64, scratch_operands = 0 : i64, tpu.core_type = #tpu.core_type<tc>, window_params = [{transform_indices = @transform_0, window_bounds = array<i64: 1, 8>}, {transform_indices = @transform_1, window_bounds = array<i64: 1, 8>}]} {
    %c0 = arith.constant 0 : index
    %c0_0 = arith.constant 0 : index
    %0 = vector.load %arg1[%c0, %c0_0] : memref<1x8xf32, #tpu.memory_space<vmem>>, vector<1x8xf32>
    %c0_1 = arith.constant 0 : index
    %c0_2 = arith.constant 0 : index
    %1 = vector.load %arg2[%c0_1, %c0_2] : memref<1x8xf32, #tpu.memory_space<vmem>>, vector<1x8xf32>
    tpu.vector_store %arg2[%c0_1, %c0_2], %0 {strides = array<i32>} : memref<1x8xf32, #tpu.memory_space<vmem>>, vector<1x8xf32>,
    return
  }
  func.func @transform_0(%arg0: i32) -> (i32, i32) {
    %c0_i32 = arith.constant 0 : i32
    %c0_i32_0 = arith.constant 0 : i32
    return %c0_i32, %arg0 : i32, i32
  }
  func.func @transform_1(%arg0: i32) -> (i32, i32) {
    %c0_i32 = arith.constant 0 : i32
    %c0_i32_0 = arith.constant 0 : i32
    return %c0_i32, %arg0 : i32, i32
  }
}

</mosaic_0001>

<llo_original>
// kernel: _expand_btpc_pallas.1
$region0: #{_expand_btpc_pallas.1}
  #allocation0 [shape = 'u32[]', space=smem, size = 0x4, offset = 0x4, fixed_abs, tag = 'smem constant byte address 0x4 - core index']
  #allocation1 [shape = 'u32[144,128]{1,0:T(1,128)}', space=vmem, size = 0x12000, scoped, tag = 'internal scratch']
  %s0 = inlined_call_operand.vmem [shape: f32[1,8], index: 0, kind: input, shape index: {}]
  %s1 = inlined_call_operand.hbm [shape: f32[1,8], index: 1, kind: output, shape index: {}]
  %s2 = sld [smem:[#allocation0]]
  $region14: #{_expand_btpc_pallas.1} parent=0
    _
  %s4 = ssub.s32 1, %s2
  %s5 = scalar_select 0, %s4, %s2
  $region1: #{_expand_btpc_pallas.1} parent=0
    #allocation2 [shape = 'u8[512]{0}', space=vmem, size = 0x400, scoped, tag = 'output window, operand 0, single buffered']
    #allocation3 [shape = 's32[1]{0}', space=sflag, size = 0x4, scoped, tag = 'scoped memory for _expand_btpc_pallas.1']
    %6 = vsyncpa [#allocation3], 0
    // Predicated region
    $region2: #{_expand_btpc_pallas.1} parent=1 // pred_check
      _
    $region3: #{_expand_btpc_pallas.1} parent=1 // pred_check_branch
      %8 = sbr.rel (0) target = $region5
    $region4: #{_expand_btpc_pallas.1} parent=1 // pred_region
      _
    $region5: #{_expand_btpc_pallas.1} parent=1 // pred_fallthru
      _
    %v9 = vld [vmem:[%s0] sm:$0x1]
    %vm10 = vcmask 57344
    %11 = vst.msk [vmem:[#allocation2] sm:$0x1] %vm10, %v9
    // Predicated region
    $region6: #{_expand_btpc_pallas.1} parent=1 // pred_check
      _
    $region7: #{_expand_btpc_pallas.1} parent=1 // pred_check_branch
      %13 = sbr.rel (0) target = $region9
    $region8: #{_expand_btpc_pallas.1} parent=1 // pred_region
      %s15 = ssub.s32 16, 16
      %16 = vsyncadd [#allocation3], %s15
      %s18 = sshll.u32 [#allocation2], 4
      %s19 = int_to_ptr.vmem [resolvable:$true] %s18
      %21 = dma.vmem_to_hbm [thread:$0]  %s19, 16, %s1, [#allocation3]
    $region9: #{_expand_btpc_pallas.1} parent=1 // pred_fallthru
      _
    // Predicated region
    $region10: #{_expand_btpc_pallas.1} parent=1 // pred_check
      _
    $region11: #{_expand_btpc_pallas.1} parent=1 // pred_check_branch
      %23 = sbr.rel (0) target = $region13
    $region12: #{_expand_btpc_pallas.1} parent=1 // pred_region
      %24 = dma.done [#allocation3], 16
    $region13: #{_expand_btpc_pallas.1} parent=1 // pred_fallthru
      _
    %25 = vsyncpa [#allocation3], 1

</llo_original>
